<compile_context>
chip_gen: v7x
topology: tpu7x:2x2x1
jax: 0.10.0
libtpu: 0.0.40
codegen_flags: <defaults>
</compile_context>

<pallas_src>
import functools

import jax
import jax.numpy as jnp
from jax import lax
from jax.experimental import pallas as pl
from jax.experimental.pallas import tpu as pltpu

N_EMBD = 384      # from the module
HEAD_SIZE = 64    # typical head_size (module takes it as a ctor arg)
BLOCK_SIZE = 256  # max context (size of the torch `tril` buffer); T <= BLOCK_SIZE
DROPOUT_P = 0.2   # not applied (eval-mode forward), see TODO below


def head_kernel(x_ref, wqkv_ref, o_ref, *, head_size, n_embd, compute_dtype):
    # x_ref: (Bb, T, C) block; wqkv_ref: (C, 3H) fused weight [k | q | v].
    bb, T, C = x_ref.shape
    H = head_size

    # ---- fused QKV projection: one MXU pass at N = 3H, f32 accumulation ----
    x2d = x_ref[...].reshape(bb * T, C)
    if compute_dtype != jnp.float32:
        x2d = x2d.astype(compute_dtype)          # weight already cast in wrapper
    qkv = jnp.dot(x2d, wqkv_ref[...],
                  preferred_element_type=jnp.float32)          # (Bb*T, 3H) f32
    qkv = qkv.reshape(bb, T, 3 * H)
    k = qkv[:, :, 0 * H:1 * H]
    q = qkv[:, :, 1 * H:2 * H]
    v = qkv[:, :, 2 * H:3 * H]

    # ---- scores: q @ k^T * C**-0.5 (reference scales by n_embd, not H) ----
    # Contract the H axes directly; no transposed copy of k is materialized.
    scale = n_embd ** (-0.5)
    wei = lax.dot_general(
        q.astype(compute_dtype), k.astype(compute_dtype),
        dimension_numbers=(((2,), (2,)), ((0,), (0,))),
        preferred_element_type=jnp.float32) * scale            # (Bb, T, T) f32

    # ---- causal mask (== tril[:T, :T]), built once per grid step ----
    row = lax.broadcasted_iota(jnp.int32, (T, T), 0)
    col = lax.broadcasted_iota(jnp.int32, (T, T), 1)
    causal = (row >= col)[None, :, :]
    wei = jnp.where(causal, wei, -jnp.inf)

    # ---- row-wise softmax in f32 (diagonal always unmasked -> finite max) ----
    m = jnp.max(wei, axis=-1, keepdims=True)
    e = jnp.exp(wei - m)
    s = jnp.sum(e, axis=-1, keepdims=True)
    p = e * pl.reciprocal(s, approx=True)                      # EUP slot

    # TODO(synk): nn.Dropout(0.2) omitted (eval-mode identity); a training-mode
    # kernel would draw a keep-mask via pltpu.prng_seed / pltpu.prng_random_bits.

    # ---- out = p @ v, batched over the block ----
    out = lax.dot_general(
        p.astype(compute_dtype), v.astype(compute_dtype),
        dimension_numbers=(((2,), (1,)), ((0,), (0,))),
        preferred_element_type=jnp.float32)                    # (Bb, T, H)
    o_ref[...] = out.astype(o_ref.dtype)


def _pick_batch_block(B, T, C, H, max_bytes=8 * 1024 * 1024):
    """Largest divisor of B whose VMEM working set stays modest (safe for the
    64 MiB v7x VMEM / 32 MiB default scoped limit) and that leaves a grid of
    length >= 2 when B >= 2 so both v7x TensorCores get work."""
    best = 1
    for bb in range(1, B + 1):
        if B % bb:
            continue
        # double-buffered x block + scores + qkv + out (f32 upper bound)
        working = 2 * bb * T * C * 4 + bb * T * T * 4 + 4 * bb * T * H * 4
        if working > max_bytes:
            continue
        if B >= 2 and B // bb < 2:
            continue
        best = bb
    return best


def head_forward(x, w_key, w_query, w_value, *, use_bf16=True):
    """x: (B, T, C) f32; w_*: (H, C) f32 (torch nn.Linear weight layout)."""
    B, T, C = x.shape
    H = w_key.shape[0]

    # Fuse the three projection weights into one (C, 3H) operand: [k | q | v].
    w_qkv = jnp.concatenate(
        [jnp.asarray(w_key, jnp.float32).T,
         jnp.asarray(w_query, jnp.float32).T,
         jnp.asarray(w_value, jnp.float32).T], axis=1)         # (C, 3H)
    compute_dtype = jnp.bfloat16 if use_bf16 else jnp.float32
    w_qkv = w_qkv.astype(compute_dtype)   # cast once -> halves per-step weight DMA

    Bb = _pick_batch_block(B, T, C, H)
    grid = (B // Bb,)

    flops = 2 * B * T * C * 3 * H + 2 * (2 * B * T * T * H)
    cost = pl.CostEstimate(
        flops=flops,
        transcendentals=B * T * T,
        bytes_accessed=(x.size * 4
                        + grid[0] * w_qkv.size * w_qkv.dtype.itemsize
                        + B * T * H * 4))

    kernel = functools.partial(
        head_kernel, head_size=H, n_embd=C, compute_dtype=compute_dtype)

    return pl.pallas_call(
        kernel,
        out_shape=jax.ShapeDtypeStruct((B, T, H), jnp.float32),
        grid=grid,
        in_specs=[
            pl.BlockSpec((Bb, T, C), lambda b: (b, 0, 0)),
            pl.BlockSpec((C, 3 * H), lambda b: (0, 0)),
        ],
        out_specs=pl.BlockSpec((Bb, T, H), lambda b: (b, 0, 0)),
        compiler_params=pltpu.CompilerParams(
            dimension_semantics=("parallel",)),
        cost_estimate=cost,
    )(x, w_qkv)


def head_reference(x, w_key, w_query, w_value):
    """Pure-JAX reference mirroring the PyTorch forward (eval mode)."""
    B, T, C = x.shape
    k = x @ w_key.T
    q = x @ w_query.T
    v = x @ w_value.T
    wei = (q @ jnp.swapaxes(k, -2, -1)) * C ** (-0.5)
    mask = jnp.tril(jnp.ones((T, T), jnp.bool_))
    wei = jnp.where(mask, wei, -jnp.inf)
    wei = jax.nn.softmax(wei, axis=-1)
    return wei @ v


if __name__ == "__main__":
    key = jax.random.PRNGKey(0)
    k_x, k_k, k_q, k_v = jax.random.split(key, 4)

    B, T = 2, 8  # small batch / seq; C fixed at n_embd=384 per the module
    x = jax.random.normal(k_x, (B, T, N_EMBD), dtype=jnp.float32)

    # nn.Linear(bias=False) default init: U(-1/sqrt(in_features), +1/sqrt(in_features))
    bound = 1.0 / (N_EMBD ** 0.5)
    w_key = jax.random.uniform(k_k, (HEAD_SIZE, N_EMBD), jnp.float32, -bound, bound)
    w_query = jax.random.uniform(k_q, (HEAD_SIZE, N_EMBD), jnp.float32, -bound, bound)
    w_value = jax.random.uniform(k_v, (HEAD_SIZE, N_EMBD), jnp.float32, -bound, bound)

    ref = head_reference(x, w_key, w_query, w_value)

    # f32-operand path (tight check; tolerance covers the approx EUP reciprocal)
    out_f32 = jax.block_until_ready(
        head_forward(x, w_key, w_query, w_value, use_bf16=False))
    assert out_f32.shape == (B, T, HEAD_SIZE)
    assert jnp.allclose(out_f32, ref, atol=5e-3, rtol=5e-3), "f32 mismatch vs reference"

    # bf16-operand / f32-accumulate path (production perf config; looser tol)
    out_bf16 = jax.block_until_ready(
        head_forward(x, w_key, w_query, w_value, use_bf16=True))
    assert out_bf16.shape == (B, T, HEAD_SIZE)
    assert jnp.allclose(out_bf16, ref, atol=5e-2, rtol=5e-2), "bf16 mismatch vs reference"

    print("KERNEL_OK")
</pallas_src>

<mosaic_0001>
module attributes {stable_mosaic.version = 11 : i64} {
  func.func @head_kernel(%arg0: i32, %arg1: memref<1x8x384xf32, #tpu.memory_space<vmem>>, %arg2: memref<384x192xf32, #tpu.memory_space<vmem>>, %arg3: memref<1x8x64xf32, #tpu.memory_space<vmem>>) attributes {dimension_semantics = [#tpu.dimension_semantics<parallel>], iteration_bounds = array<i64: 2>, scalar_prefetch = 0 : i64, scratch_operands = 0 : i64, tpu.core_type = #tpu.core_type<tc>, window_params = [{transform_indices = @transform_0, window_bounds = array<i64: 1, 8, 384>}, {pipeline_mode = #tpu.pipeline_mode<synchronous>, transform_indices = @transform_1, window_bounds = array<i64: 384, 192>}, {transform_indices = @transform_2, window_bounds = array<i64: 1, 8, 64>}]} {
    %c0 = arith.constant 0 : index
    %c0_0 = arith.constant 0 : index
    %c0_1 = arith.constant 0 : index
    %0 = vector.load %arg1[%c0, %c0_0, %c0_1] : memref<1x8x384xf32, #tpu.memory_space<vmem>>, vector<1x8x384xf32>
    %1 = vector.shape_cast %0 : vector<1x8x384xf32> to vector<8x384xf32>
    %c0_2 = arith.constant 0 : index
    %c0_3 = arith.constant 0 : index
    %2 = vector.load %arg2[%c0_2, %c0_3] : memref<384x192xf32, #tpu.memory_space<vmem>>, vector<384x192xf32>
    %cst = arith.constant dense<0.000000e+00> : vector<8x192xf32>
    %3 = tpu.matmul %1, %2, %cst {dimension_numbers = #tpu.dot_dimension_numbers<[1], [0], [0], [1], [0, 0, 1, 1], [], []>} : vector<8x384xf32>, vector<384x192xf32>, vector<8x192xf32> -> vector<8x192xf32>
    %4 = vector.shape_cast %3 : vector<8x192xf32> to vector<1x8x192xf32>
    %5 = vector.extract_strided_slice %4 {offsets = [0, 0, 0], sizes = [1, 8, 64], strides = [1, 1, 1]} : vector<1x8x192xf32> to vector<1x8x64xf32>
    %6 = vector.extract_strided_slice %4 {offsets = [0, 0, 64], sizes = [1, 8, 64], strides = [1, 1, 1]} : vector<1x8x192xf32> to vector<1x8x64xf32>
    %7 = vector.extract_strided_slice %4 {offsets = [0, 0, 128], sizes = [1, 8, 64], strides = [1, 1, 1]} : vector<1x8x192xf32> to vector<1x8x64xf32>
    %cst_4 = arith.constant dense<0.000000e+00> : vector<1x8x8xf32>
    %8 = tpu.matmul %6, %5, %cst_4 {dimension_numbers = #tpu.dot_dimension_numbers<[2], [2], [1], [1], [0, 0, 0, 1, 1, 1], [0], [0]>} : vector<1x8x64xf32>, vector<1x8x64xf32>, vector<1x8x8xf32> -> vector<1x8x8xf32>
    %cst_5 = arith.constant 0.0510310382 : f32
    %9 = vector.broadcast %cst_5 : f32 to vector<1x8x8xf32>
    %10 = arith.mulf %8, %9 : vector<1x8x8xf32>
    %11 = tpu.iota {dimensions = array<i32: 0>} : vector<8x8xi32>
    %12 = tpu.iota {dimensions = array<i32: 1>} : vector<8x8xi32>
    %13 = arith.cmpi sge, %11, %12 : vector<8x8xi32>
    %14 = vector.shape_cast %13 : vector<8x8xi1> to vector<1x8x8xi1>
    %cst_6 = arith.constant 0xFF800000 : f32
    %15 = vector.broadcast %cst_6 : f32 to vector<1x8x8xf32>
    %16 = arith.select %14, %10, %15 : vector<1x8x8xi1>, vector<1x8x8xf32>
    %cst_7 = arith.constant dense<0xFF800000> : vector<1x8xf32>
    %17 = vector.multi_reduction <maximumf>, %16, %cst_7 [2] : vector<1x8x8xf32> to vector<1x8xf32>
    %18 = vector.shape_cast %17 : vector<1x8xf32> to vector<1x8x1xf32>
    %19 = vector.broadcast %18 : vector<1x8x1xf32> to vector<1x8x8xf32>
    %20 = arith.subf %16, %19 : vector<1x8x8xf32>
    %21 = math.exp %20 : vector<1x8x8xf32>
    %cst_8 = arith.constant dense<0.000000e+00> : vector<1x8xf32>
    %22 = vector.multi_reduction <add>, %21, %cst_8 [2] : vector<1x8x8xf32> to vector<1x8xf32>
    %23 = vector.shape_cast %22 : vector<1x8xf32> to vector<1x8x1xf32>
    %24 = tpu.reciprocal %23 {approx = true} : vector<1x8x1xf32> -> vector<1x8x1xf32>
    %25 = vector.broadcast %24 : vector<1x8x1xf32> to vector<1x8x8xf32>
    %26 = arith.mulf %21, %25 : vector<1x8x8xf32>
    %cst_9 = arith.constant dense<0.000000e+00> : vector<1x8x64xf32>
    %27 = tpu.matmul %26, %7, %cst_9 {dimension_numbers = #tpu.dot_dimension_numbers<[2], [1], [1], [2], [0, 0, 0, 1, 1, 2], [0], [0]>} : vector<1x8x8xf32>, vector<1x8x64xf32>, vector<1x8x64xf32> -> vector<1x8x64xf32>
    %c0_10 = arith.constant 0 : index
    %c0_11 = arith.constant 0 : index
    %c0_12 = arith.constant 0 : index
    %28 = vector.load %arg3[%c0_10, %c0_11, %c0_12] : memref<1x8x64xf32, #tpu.memory_space<vmem>>, vector<1x8x64xf32>
    tpu.vector_store %arg3[%c0_10, %c0_11, %c0_12], %27 {strides = array<i32>} : memref<1x8x64xf32, #tpu.memory_space<vmem>>, vector<1x8x64xf32>,
    return
  }
  func.func @transform_0(%arg0: i32) -> (i32, i32, i32) {
    %c0_i32 = arith.constant 0 : i32
    %c0_i32_0 = arith.constant 0 : i32
    %c0_i32_1 = arith.constant 0 : i32
    return %arg0, %c0_i32, %c0_i32_0 : i32, i32, i32
  }
  func.func @transform_1(%arg0: i32) -> (i32, i32) {
    %c0_i32 = arith.constant 0 : i32
    %c0_i32_0 = arith.constant 0 : i32
    %c0_i32_1 = arith.constant 0 : i32
    return %c0_i32, %c0_i32_0 : i32, i32
  }
  func.func @transform_2(%arg0: i32) -> (i32, i32, i32) {
    %c0_i32 = arith.constant 0 : i32
    %c0_i32_0 = arith.constant 0 : i32
    %c0_i32_1 = arith.constant 0 : i32
    return %arg0, %c0_i32, %c0_i32_0 : i32, i32, i32
  }
}

</mosaic_0001>

<llo_original>
// kernel: tpu_custom_call.1
$region0: #{tpu_custom_call.1}
  #allocation0 [shape = 'u32[]', space=smem, size = 0x4, offset = 0x4, fixed_abs, tag = 'smem constant byte address 0x4 - core index']
  #allocation1 [shape = 'u32[144,128]{1,0:T(1,128)}', space=vmem, size = 0x12000, scoped, tag = 'internal scratch']
  %s0 = inlined_call_operand.vmem [shape: f32[2,8,384], index: 0, kind: input, shape index: {}]
  %s1 = inlined_call_operand.vmem [shape: f32[384,192], index: 1, kind: input, shape index: {}]
  %s2 = inlined_call_operand.hbm [shape: f32[2,8,64], index: 2, kind: output, shape index: {}]
  %s3 = sld [smem:[#allocation0]]
  $region41: #{tpu_custom_call.1} parent=0
    _
  %s5 = ssub.s32 1, %s3
  %s6 = scalar_select 0, %s5, %s3
  $region1: #{tpu_custom_call.1} parent=0
    #allocation2 [shape = 'u8[8192]{0}', space=vmem, size = 0x2000, scoped, tag = 'output window, operand 0']
    #allocation3 [shape = 's32[2]{0}', space=sflag, size = 0x8, scoped, tag = 'scoped memory for tpu_custom_call.1']
    %7 = vsyncpa [#allocation3], 0
    %s8 = scalar_lea.sflag [#allocation3], 1
    %9 = vsyncpa %s8, 0
    loop: start=0, step=1, limit=4
    $region2: #{tpu_custom_call.1} parent=1 // loop_pre_header
      _
    $region3: #{tpu_custom_call.1} parent=1 // loop_header
      %s11 = sphi 0, %s15
      %p12 = scmp.ge.s32.totalorder %s11, 4
      %s21 = sphi 0, %s23
      %s24 = sphi 0, %s21
      %s25 = sphi 0, %s24
      %s41 = sphi 0, %s25
      %s45 = sphi 0, %s45
      %s47 = sphi 0, %s45
      %s48 = sphi 0, %s47
      %s62 = sphi 0, %s48
      %s68 = sphi 0, %s70
      %s71 = sphi 0, %s68
      %s72 = sphi 0, %s71
      %s88 = sphi 0, %s72
    $region4: #{tpu_custom_call.1} parent=1 // loop_header_branch
      %14 = sbr.rel (%p12) target = $region8
    $region5: #{tpu_custom_call.1} parent=1 // loop_body
      %s16 = ssub.s32 %s11, 1
      %s17 = ssub.s32 %s11, 2
      %s18 = sadd.s32 %s11, 1
      %s19 = ssub.s32 %s11, %s18
      %p20 = scmp.eq.s32.totalorder %s19, 0
      %s22 = sadd.s32 %s21, 1
      %s23 = scalar_select %p20, %s21, %s22
      %p26 = pneg %p20
      %p27 = scmp.eq.s32.totalorder %s11, 1
      %p28 = por %p26, %p27
      %p29 = scmp.ne.s32.totalorder %s21, %s24
      %p30 = scmp.eq.s32.totalorder %s11, 0
      %p31 = por %p29, %p30
      %p32 = scmp.ne.s32.totalorder %s21, %s24
      %p33 = scmp.eq.s32.totalorder %s16, 1
      %p34 = por %p32, %p33
      %p35 = scmp.ne.s32.totalorder %s24, %s25
      %p36 = scmp.eq.s32.totalorder %s16, 0
      %p37 = por %p35, %p36
      %p38 = scmp.ne.s32.totalorder %s24, %s25
      %p39 = scmp.eq.s32.totalorder %s17, 1
      %p40 = por %p38, %p39
      %p42 = scmp.ne.s32.totalorder %s25, %s41
      %p43 = scmp.eq.s32.totalorder %s17, 0
      %p44 = por %p42, %p43
      %s46 = sadd.s32 %s45, 1
      %p49 = scmp.eq.s32.totalorder %s11, 1
      %p50 = scmp.ne.s32.totalorder %s45, %s47
      %p51 = scmp.eq.s32.totalorder %s11, 0
      %p52 = por %p50, %p51
      %p53 = scmp.ne.s32.totalorder %s45, %s47
      %p54 = scmp.eq.s32.totalorder %s16, 1
      %p55 = por %p53, %p54
      %p56 = scmp.ne.s32.totalorder %s47, %s48
      %p57 = scmp.eq.s32.totalorder %s16, 0
      %p58 = por %p56, %p57
      %p59 = scmp.ne.s32.totalorder %s47, %s48
      %p60 = scmp.eq.s32.totalorder %s17, 1
      %p61 = por %p59, %p60
      %p63 = scmp.ne.s32.totalorder %s48, %s62
      %p64 = scmp.eq.s32.totalorder %s17, 0
      %p65 = por %p63, %p64
      %s66 = ssub.s32 %s11, %s18
      %p67 = scmp.eq.s32.totalorder %s66, 0
      %s69 = sadd.s32 %s68, 1
      %s70 = scalar_select %p67, %s68, %s69
      %p73 = pneg %p67
      %p74 = scmp.eq.s32.totalorder %s11, 1
      %p75 = por %p73, %p74
      %p76 = scmp.ne.s32.totalorder %s68, %s71
      %p77 = scmp.eq.s32.totalorder %s11, 0
      %p78 = por %p76, %p77
      %p79 = scmp.ne.s32.totalorder %s68, %s71
      %p80 = scmp.eq.s32.totalorder %s16, 1
      %p81 = por %p79, %p80
      %p82 = scmp.ne.s32.totalorder %s71, %s72
      %p83 = scmp.eq.s32.totalorder %s16, 0
      %p84 = por %p82, %p83
      %p85 = scmp.ne.s32.totalorder %s71, %s72
      %p86 = scmp.eq.s32.totalorder %s17, 1
      %p87 = por %p85, %p86
      %p89 = scmp.ne.s32.totalorder %s72, %s88
      %p90 = scmp.eq.s32.totalorder %s17, 0
      %p91 = por %p89, %p90
      %p92 = scmp.le.s32.totalorder 1, %s11
      %p93 = scmp.lt.s32.totalorder %s11, 3
      %p94 = pnand %p92, %p93
      %p95 = pneg %p94
      // Predicated region
      $region9: #{tpu_custom_call.1} parent=5 // pred_check
        _
      $region10: #{tpu_custom_call.1} parent=5 // pred_check_branch
        %97 = sbr.rel (%p94) target = $region12
      $region11: #{tpu_custom_call.1} parent=5 // pred_region
        %s98 = ssub.s32 %s11, 1
        // Predicated region
        $region13: #{tpu_custom_call.1} parent=11 // pred_check
          %p99 = pneg %p58
        $region14: #{tpu_custom_call.1} parent=11 // pred_check_branch
          %101 = sbr.rel (%p99) target = $region16
        $region15: #{tpu_custom_call.1} parent=11 // pred_region
          _
        $region16: #{tpu_custom_call.1} parent=11 // pred_fallthru
          _
      $region12: #{tpu_custom_call.1} parent=5 // pred_fallthru
        _
      %p102 = scmp.lt.s32.totalorder %s11, 2
      // Predicated region
      $region17: #{tpu_custom_call.1} parent=5 // pred_check
        %p103 = pneg %p102
      $region18: #{tpu_custom_call.1} parent=5 // pred_check_branch
        %105 = sbr.rel (%p103) target = $region20
      $region19: #{tpu_custom_call.1} parent=5 // pred_region
        // Predicated region
        $region21: #{tpu_custom_call.1} parent=19 // pred_check
          %p106 = pneg %p31
        $region22: #{tpu_custom_call.1} parent=19 // pred_check_branch
          %108 = sbr.rel (%p106) target = $region24
        $region23: #{tpu_custom_call.1} parent=19 // pred_region
          %p109 = scmp.lt.s32.totalorder %s11, 1
          %s110 = scalar_select %p109, %s11, 1
          %s111 = smul.addr %s110, 3
          %s112 = smul.addr %s111, 8
          %s113 = scalar_lea.vmem %s0, %s112
        $region24: #{tpu_custom_call.1} parent=19 // pred_fallthru
          _
      $region20: #{tpu_custom_call.1} parent=5 // pred_fallthru
        _
      %p114 = scmp.le.s32.totalorder 1, %s11
      %p115 = scmp.lt.s32.totalorder %s11, 3
      %p116 = pnand %p114, %p115
      %p117 = pneg %p116
      // Predicated region
      $region25: #{tpu_custom_call.1} parent=5 // pred_check
        _
      $region26: #{tpu_custom_call.1} parent=5 // pred_check_branch
        %119 = sbr.rel (%p116) target = $region28
      $region27: #{tpu_custom_call.1} parent=5 // pred_region
        %s120 = ssub.s32 %s11, 1
        %p121 = scmp.lt.s32.totalorder %s16, 1
        %s122 = scalar_select %p121, %s16, 1
        %s123 = smul.addr %s122, 3
        %s124 = smul.addr %s123, 8
        %s125 = scalar_lea.vmem %s0, %s124
        %p126 = pneg %p37
        %p127 = pneg %p34
        %p128 = pneg %p58
        %p129 = pneg %p55
        %p130 = pneg %p84
        %p131 = pneg %p81
        %s132 = sand.u32 %s71, 1
        %s133 = scalar_lea.sflag [#allocation3], %s132
        %s134 = sand.u32 %s71, 1
        %s135 = smul.addr %s134, 8
        %s136 = scalar_lea.vmem [#allocation2], %s135
        %p137 = scmp.lt.s32.totalorder %s16, 1
        %s138 = scalar_select %p137, %s16, 1
        %s139 = smul.addr %s138, 3
        %s140 = smul.addr %s139, 8
        %s141 = scalar_lea.vmem %s0, %s140
        %v142 = vld [vmem:[%s141] sm:$0xff]
        %v143 = vld [vmem:[%s141 + $0x8] sm:$0xff]
        %v144 = vld [vmem:[%s141 + $0x10] sm:$0xff]
        %v145 = vld [vmem:[%s1] sm:$0xff]
        %v146 = vld [vmem:[%s1 + $0x8] sm:$0xff]
        %v147 = vld [vmem:[%s1 + $0x10] sm:$0xff]
        %v148 = vld [vmem:[%s1 + $0x18] sm:$0xff]
        %v149 = vld [vmem:[%s1 + $0x20] sm:$0xff]
        %v150 = vld [vmem:[%s1 + $0x28] sm:$0xff]
        %v151 = vld [vmem:[%s1 + $0x30] sm:$0xff]
        %v152 = vld [vmem:[%s1 + $0x38] sm:$0xff]
        %v153 = vld [vmem:[%s1 + $0x40] sm:$0xff]
        %v154 = vld [vmem:[%s1 + $0x48] sm:$0xff]
        %v155 = vld [vmem:[%s1 + $0x50] sm:$0xff]
        %v156 = vld [vmem:[%s1 + $0x58] sm:$0xff]
        %v157 = vld [vmem:[%s1 + $0x60] sm:$0xff]
        %v158 = vld [vmem:[%s1 + $0x68] sm:$0xff]
        %v159 = vld [vmem:[%s1 + $0x70] sm:$0xff]
        %v160 = vld [vmem:[%s1 + $0x78] sm:$0xff]
        %v161 = vld [vmem:[%s1 + $0x80] sm:$0xff]
        %v162 = vld [vmem:[%s1 + $0x88] sm:$0xff]
        %v163 = vld [vmem:[%s1 + $0x90] sm:$0xff]
        %v164 = vld [vmem:[%s1 + $0x98] sm:$0xff]
        %v165 = vld [vmem:[%s1 + $0xa0] sm:$0xff]
        %v166 = vld [vmem:[%s1 + $0xa8] sm:$0xff]
        %v167 = vld [vmem:[%s1 + $0xb0] sm:$0xff]
        %v168 = vld [vmem:[%s1 + $0xb8] sm:$0xff]
        %v169 = vld [vmem:[%s1 + $0xc0] sm:$0xff]
        %v170 = vld [vmem:[%s1 + $0xc8] sm:$0xff]
        %v171 = vld [vmem:[%s1 + $0xd0] sm:$0xff]
        %v172 = vld [vmem:[%s1 + $0xd8] sm:$0xff]
        %v173 = vld [vmem:[%s1 + $0xe0] sm:$0xff]
        %v174 = vld [vmem:[%s1 + $0xe8] sm:$0xff]
        %v175 = vld [vmem:[%s1 + $0xf0] sm:$0xff]
        %v176 = vld [vmem:[%s1 + $0xf8] sm:$0xff]
        %v177 = vld [vmem:[%s1 + $0x100] sm:$0xff]
        %v178 = vld [vmem:[%s1 + $0x108] sm:$0xff]
        %v179 = vld [vmem:[%s1 + $0x110] sm:$0xff]
        %v180 = vld [vmem:[%s1 + $0x118] sm:$0xff]
        %v181 = vld [vmem:[%s1 + $0x120] sm:$0xff]
        %v182 = vld [vmem:[%s1 + $0x128] sm:$0xff]
        %v183 = vld [vmem:[%s1 + $0x130] sm:$0xff]
        %v184 = vld [vmem:[%s1 + $0x138] sm:$0xff]
        %v185 = vld [vmem:[%s1 + $0x140] sm:$0xff]
        %v186 = vld [vmem:[%s1 + $0x148] sm:$0xff]
        %v187 = vld [vmem:[%s1 + $0x150] sm:$0xff]
        %v188 = vld [vmem:[%s1 + $0x158] sm:$0xff]
        %v189 = vld [vmem:[%s1 + $0x160] sm:$0xff]
        %v190 = vld [vmem:[%s1 + $0x168] sm:$0xff]
        %v191 = vld [vmem:[%s1 + $0x170] sm:$0xff]
        %v192 = vld [vmem:[%s1 + $0x178] sm:$0xff]
        %v193 = vld [vmem:[%s1 + $0x180] sm:$0xff]
        %v194 = vld [vmem:[%s1 + $0x188] sm:$0xff]
        %v195 = vld [vmem:[%s1 + $0x190] sm:$0xff]
        %v196 = vld [vmem:[%s1 + $0x198] sm:$0xff]
        %v197 = vld [vmem:[%s1 + $0x1a0] sm:$0xff]
        %v198 = vld [vmem:[%s1 + $0x1a8] sm:$0xff]
        %v199 = vld [vmem:[%s1 + $0x1b0] sm:$0xff]
        %v200 = vld [vmem:[%s1 + $0x1b8] sm:$0xff]
        %v201 = vld [vmem:[%s1 + $0x1c0] sm:$0xff]
        %v202 = vld [vmem:[%s1 + $0x1c8] sm:$0xff]
        %v203 = vld [vmem:[%s1 + $0x1d0] sm:$0xff]
        %v204 = vld [vmem:[%s1 + $0x1d8] sm:$0xff]
        %v205 = vld [vmem:[%s1 + $0x1e0] sm:$0xff]
        %v206 = vld [vmem:[%s1 + $0x1e8] sm:$0xff]
        %v207 = vld [vmem:[%s1 + $0x1f0] sm:$0xff]
        %v208 = vld [vmem:[%s1 + $0x1f8] sm:$0xff]
        %v209 = vld [vmem:[%s1 + $0x200] sm:$0xff]
        %v210 = vld [vmem:[%s1 + $0x208] sm:$0xff]
        %v211 = vld [vmem:[%s1 + $0x210] sm:$0xff]
        %v212 = vld [vmem:[%s1 + $0x218] sm:$0xff]
        %v213 = vld [vmem:[%s1 + $0x220] sm:$0xff]
        %v214 = vld [vmem:[%s1 + $0x228] sm:$0xff]
        %v215 = vld [vmem:[%s1 + $0x230] sm:$0xff]
        %v216 = vld [vmem:[%s1 + $0x238] sm:$0xff]
        %v217 = vld [vmem:[%s1 + $0x240] sm:$0xff]
        %v218 = vld [vmem:[%s1 + $0x248] sm:$0xff]
        %v219 = vld [vmem:[%s1 + $0x250] sm:$0xff]
        %v220 = vld [vmem:[%s1 + $0x258] sm:$0xff]
        %v221 = vld [vmem:[%s1 + $0x260] sm:$0xff]
        %v222 = vld [vmem:[%s1 + $0x268] sm:$0xff]
        %v223 = vld [vmem:[%s1 + $0x270] sm:$0xff]
        %v224 = vld [vmem:[%s1 + $0x278] sm:$0xff]
        %v225 = vld [vmem:[%s1 + $0x280] sm:$0xff]
        %v226 = vld [vmem:[%s1 + $0x288] sm:$0xff]
        %v227 = vld [vmem:[%s1 + $0x290] sm:$0xff]
        %v228 = vld [vmem:[%s1 + $0x298] sm:$0xff]
        %v229 = vld [vmem:[%s1 + $0x2a0] sm:$0xff]
        %v230 = vld [vmem:[%s1 + $0x2a8] sm:$0xff]
        %v231 = vld [vmem:[%s1 + $0x2b0] sm:$0xff]
        %v232 = vld [vmem:[%s1 + $0x2b8] sm:$0xff]
        %v233 = vld [vmem:[%s1 + $0x2c0] sm:$0xff]
        %v234 = vld [vmem:[%s1 + $0x2c8] sm:$0xff]
        %v235 = vld [vmem:[%s1 + $0x2d0] sm:$0xff]
        %v236 = vld [vmem:[%s1 + $0x2d8] sm:$0xff]
        %v237 = vld [vmem:[%s1 + $0x2e0] sm:$0xff]
        %v238 = vld [vmem:[%s1 + $0x2e8] sm:$0xff]
        %v239 = vld [vmem:[%s1 + $0x2f0] sm:$0xff]
        %v240 = vld [vmem:[%s1 + $0x2f8] sm:$0xff]
        %241 = vmatprep.subr.mxu0 %v146
        %242 = vmatpush1.msra.mxu0 %v145
        %243 = vmatprep.subr.mxu0 %v148
        %244 = vmatpush1.msra.mxu0 %v147
        %245 = vmatprep.subr.mxu0 %v150
        %246 = vmatpush1.msra.mxu0 %v149
        %247 = vmatprep.subr.mxu0 %v152
        %248 = vmatpush1.msra.mxu0 %v151
        %249 = vmatprep.subr.mxu0 %v154
        %250 = vmatpush1.msra.mxu0 %v153
        %251 = vmatprep.subr.mxu0 %v156
        %252 = vmatpush1.msra.mxu0 %v155
        %253 = vmatprep.subr.mxu0 %v158
        %254 = vmatpush1.msra.mxu0 %v157
        %255 = vmatprep.subr.mxu0 %v160
        %256 = vmatpush1.msra.mxu0 %v159
        %257 = vmatprep.subr.mxu0 %v162
        %258 = vmatpush1.msra.mxu0 %v161
        %259 = vmatprep.subr.mxu0 %v164
        %260 = vmatpush1.msra.mxu0 %v163
        %261 = vmatprep.subr.mxu0 %v166
        %262 = vmatpush1.msra.mxu0 %v165
        %263 = vmatprep.subr.mxu0 %v168
        %264 = vmatpush1.msra.mxu0 %v167
        %265 = vmatprep.subr.mxu0 %v170
        %266 = vmatpush1.msra.mxu0 %v169
        %267 = vmatprep.subr.mxu0 %v172
        %268 = vmatpush1.msra.mxu0 %v171
        %269 = vmatprep.subr.mxu0 %v174
        %270 = vmatpush1.msra.mxu0 %v173
        %271 = vmatprep.subr.mxu0 %v176
        %272 = vmatpush1.msra.mxu0 %v175
        %273 = vmatprep.subr.mxu0 %v178
        %274 = vmatpush1.msra.mxu0 %v177
        %275 = vmatprep.subr.mxu0 %v180
        %276 = vmatpush1.msra.mxu0 %v179
        %277 = vmatprep.subr.mxu0 %v182
        %278 = vmatpush1.msra.mxu0 %v181
        %279 = vmatprep.subr.mxu0 %v184
        %280 = vmatpush1.msra.mxu0 %v183
        %281 = vmatprep.subr.mxu0 %v186
        %282 = vmatpush1.msra.mxu0 %v185
        %283 = vmatprep.subr.mxu0 %v188
        %284 = vmatpush1.msra.mxu0 %v187
        %285 = vmatprep.subr.mxu0 %v190
        %286 = vmatpush1.msra.mxu0 %v189
        %287 = vmatprep.subr.mxu0 %v192
        %288 = vmatpush1.msra.mxu0 %v191
        %289 = vmatprep.subr.mxu0 %v194
        %290 = vmatpush1.msra.mxu0 %v193
        %291 = vmatprep.subr.mxu0 %v196
        %292 = vmatpush1.msra.mxu0 %v195
        %293 = vmatprep.subr.mxu0 %v198
        %294 = vmatpush1.msra.mxu0 %v197
        %295 = vmatprep.subr.mxu0 %v200
        %296 = vmatpush1.msra.mxu0 %v199
        %297 = vmatprep.subr.mxu0 %v202
        %298 = vmatpush1.msra.mxu0 %v201
        %299 = vmatprep.subr.mxu0 %v204
        %300 = vmatpush1.msra.mxu0 %v203
        %301 = vmatprep.subr.mxu0 %v206
        %302 = vmatpush1.msra.mxu0 %v205
        %303 = vmatprep.subr.mxu0 %v208
        %304 = vmatpush1.msra.mxu0 %v207
        %305 = vmatprep.mubr.f32.mxu0 %v143
        %306 = vmatmul.mubr.f32.gmra.mrb[0].mxu0 %v142
        %v307 = vpop.f32.mrb[0].mxu0
        %v308 = vadd.f32 0.0, %v307
        %v309 = vpop.f32.mrb[0].mxu0
        %v310 = vadd.f32 0.0, %v309
        %311 = vdwg.mxu0
        %312 = vmatprep.subr.mxu0 %v210
        %313 = vmatpush1.msra.mxu0 %v209
        %314 = vmatprep.subr.mxu0 %v212
        %315 = vmatpush1.msra.mxu0 %v211
        %316 = vmatprep.subr.mxu0 %v214
        %317 = vmatpush1.msra.mxu0 %v213
        %318 = vmatprep.subr.mxu0 %v216
        %319 = vmatpush1.msra.mxu0 %v215
        %320 = vmatprep.subr.mxu0 %v218
        %321 = vmatpush1.msra.mxu0 %v217
        %322 = vmatprep.subr.mxu0 %v220
        %323 = vmatpush1.msra.mxu0 %v219
        %324 = vmatprep.subr.mxu0 %v222
        %325 = vmatpush1.msra.mxu0 %v221
        %326 = vmatprep.subr.mxu0 %v224
        %327 = vmatpush1.msra.mxu0 %v223
        %328 = vmatprep.subr.mxu0 %v226
        %329 = vmatpush1.msra.mxu0 %v225
        %330 = vmatprep.subr.mxu0 %v228
        %331 = vmatpush1.msra.mxu0 %v227
        %332 = vmatprep.subr.mxu0 %v230
        %333 = vmatpush1.msra.mxu0 %v229
        %334 = vmatprep.subr.mxu0 %v232
        %335 = vmatpush1.msra.mxu0 %v231
        %336 = vmatprep.subr.mxu0 %v234
        %337 = vmatpush1.msra.mxu0 %v233
        %338 = vmatprep.subr.mxu0 %v236
        %339 = vmatpush1.msra.mxu0 %v235
        %340 = vmatprep.subr.mxu0 %v238
        %341 = vmatpush1.msra.mxu0 %v237
        %342 = vmatprep.subr.mxu0 %v240
        %343 = vmatpush1.msra.mxu0 %v239
        %344 = vmatprep.subr.mxu0 0.0
        %345 = vmatpush1.msra.mxu0 0.0
        %346 = vmatprep.subr.mxu0 0.0
        %347 = vmatpush1.msra.mxu0 0.0
        %348 = vmatprep.subr.mxu0 0.0
        %349 = vmatpush1.msra.mxu0 0.0
        %350 = vmatprep.subr.mxu0 0.0
        %351 = vmatpush1.msra.mxu0 0.0
        %352 = vmatprep.subr.mxu0 0.0
        %353 = vmatpush1.msra.mxu0 0.0
        %354 = vmatprep.subr.mxu0 0.0
        %355 = vmatpush1.msra.mxu0 0.0
        %356 = vmatprep.subr.mxu0 0.0
        %357 = vmatpush1.msra.mxu0 0.0
        %358 = vmatprep.subr.mxu0 0.0
        %359 = vmatpush1.msra.mxu0 0.0
        %360 = vmatprep.subr.mxu0 0.0
        %361 = vmatpush1.msra.mxu0 0.0
        %362 = vmatprep.subr.mxu0 0.0
        %363 = vmatpush1.msra.mxu0 0.0
        %364 = vmatprep.subr.mxu0 0.0
        %365 = vmatpush1.msra.mxu0 0.0
        %366 = vmatprep.subr.mxu0 0.0
        %367 = vmatpush1.msra.mxu0 0.0
        %368 = vmatprep.subr.mxu0 0.0
        %369 = vmatpush1.msra.mxu0 0.0
        %370 = vmatprep.subr.mxu0 0.0
        %371 = vmatpush1.msra.mxu0 0.0
        %372 = vmatprep.subr.mxu0 0.0
        %373 = vmatpush1.msra.mxu0 0.0
        %374 = vmatprep.subr.mxu0 0.0
        %375 = vmatpush1.msra.mxu0 0.0
        %376 = vmatprep.mubr.f32.mxu0 0.0
        %377 = vmatmul.mubr.f32.gmra.mrb[0].mxu0 %v144
        %v378 = vpop.f32.mrb[0].mxu0
        %v379 = vadd.f32 %v308, %v378
        %v380 = vpop.f32.mrb[0].mxu0
        %v381 = vadd.f32 %v310, %v380
        %382 = vdwg.mxu0
        %384 = vrot.lane.b32.xlu0 %v379, 64
        %v385 = vpop.permute.xlu0 %384
        %vm386 = vcmask 523264
        %v387 = vsel %vm386, %v385, 0
        %v389 = vsel %vm386, %v379, 0
        %391 = vmatprep.subr.mxu0 0.0
        %392 = vmatpush1.xpose.msra.mxu0 %v389
        %393 = vmatprep.subr.mxu0 0.0
        %394 = vmatpush1.xpose.msra.mxu0 0.0
        %395 = vmatprep.subr.mxu0 0.0
        %396 = vmatpush1.xpose.msra.mxu0 0.0
        %397 = vmatprep.subr.mxu0 0.0
        %398 = vmatpush1.xpose.msra.mxu0 0.0
        %399 = vmatprep.subr.mxu0 0.0
        %400 = vmatpush1.xpose.msra.mxu0 0.0
        %401 = vmatprep.subr.mxu0 0.0
        %402 = vmatpush1.xpose.msra.mxu0 0.0
        %403 = vmatprep.subr.mxu0 0.0
        %404 = vmatpush1.xpose.msra.mxu0 0.0
        %405 = vmatprep.subr.mxu0 0.0
        %406 = vmatpush1.xpose.msra.mxu0 0.0
        %407 = vmatprep.subr.mxu0 0.0
        %408 = vmatpush1.xpose.msra.mxu0 0.0
        %409 = vmatprep.subr.mxu0 0.0
        %410 = vmatpush1.xpose.msra.mxu0 0.0
        %411 = vmatprep.subr.mxu0 0.0
        %412 = vmatpush1.xpose.msra.mxu0 0.0
        %413 = vmatprep.subr.mxu0 0.0
        %414 = vmatpush1.xpose.msra.mxu0 0.0
        %415 = vmatprep.subr.mxu0 0.0
        %416 = vmatpush1.xpose.msra.mxu0 0.0
        %417 = vmatprep.subr.mxu0 0.0
        %418 = vmatpush1.xpose.msra.mxu0 0.0
        %419 = vmatprep.subr.mxu0 0.0
        %420 = vmatpush1.xpose.msra.mxu0 0.0
        %421 = vmatprep.subr.mxu0 0.0
        %422 = vmatpush1.xpose.msra.mxu0 0.0
        %423 = vmatprep.subr.mxu0 0.0
        %424 = vmatpush1.xpose.msra.mxu0 0.0
        %425 = vmatprep.subr.mxu0 0.0
        %426 = vmatpush1.xpose.msra.mxu0 0.0
        %427 = vmatprep.subr.mxu0 0.0
        %428 = vmatpush1.xpose.msra.mxu0 0.0
        %429 = vmatprep.subr.mxu0 0.0
        %430 = vmatpush1.xpose.msra.mxu0 0.0
        %431 = vmatprep.subr.mxu0 0.0
        %432 = vmatpush1.xpose.msra.mxu0 0.0
        %433 = vmatprep.subr.mxu0 0.0
        %434 = vmatpush1.xpose.msra.mxu0 0.0
        %435 = vmatprep.subr.mxu0 0.0
        %436 = vmatpush1.xpose.msra.mxu0 0.0
        %437 = vmatprep.subr.mxu0 0.0
        %438 = vmatpush1.xpose.msra.mxu0 0.0
        %439 = vmatprep.subr.mxu0 0.0
        %440 = vmatpush1.xpose.msra.mxu0 0.0
        %441 = vmatprep.subr.mxu0 0.0
        %442 = vmatpush1.xpose.msra.mxu0 0.0
        %443 = vmatprep.subr.mxu0 0.0
        %444 = vmatpush1.xpose.msra.mxu0 0.0
        %445 = vmatprep.subr.mxu0 0.0
        %446 = vmatpush1.xpose.msra.mxu0 0.0
        %447 = vmatprep.subr.mxu0 0.0
        %448 = vmatpush1.xpose.msra.mxu0 0.0
        %449 = vmatprep.subr.mxu0 0.0
        %450 = vmatpush1.xpose.msra.mxu0 0.0
        %451 = vmatprep.subr.mxu0 0.0
        %452 = vmatpush1.xpose.msra.mxu0 0.0
        %453 = vmatprep.subr.mxu0 0.0
        %454 = vmatpush1.xpose.msra.mxu0 0.0
        %455 = vmatprep.mubr.f32.mxu0 0.0
        %456 = vmatmul.mubr.f32.gmra.mrb[0].mxu0 %v387
        %v457 = vpop.f32.mrb[0].mxu0
        %v458 = vadd.f32 0.0, %v457
        %v459 = vpop.f32.mrb[0].mxu0
        %460 = vdwg.mxu0
        %v461 = vmul.f32 %v458, 0.05103104
        %v462 = vlaneseq
        %v463 = vshrl.u32 %v462, 7
        %v464 = vlaneseq
        %v465 = vand.u32 %v464, 127
        %vm466 = vcmp.ge.s32.totalorder %v463, %v465
        %v467 = vsel %vm466, %v461, -inf
        %vm468 = vcmask 64512
        %v469 = vsel %vm468, %v467, -inf
        %470 = vmax.xlane.f32.xlu0 %v469
        %v471 = vpop.xlane.xlu0 %470
        %v472 = vsub.f32 %v467, %v471
        %v473 = vmul.f32 %v472, 1.442695
        %v474 = vpow.pop %v473
        %v475 = vsel %vm468, %v474, 0.0
        %476 = vadd.xlane.f32.xlu0 %v475
        %v477 = vpop.xlane.xlu0 %476
        %v478 = vrcp.pop %v477
        %v479 = vmul.f32 %v474, %v478
        %v481 = vsel %vm468, %v479, 0
        %483 = vmatprep.subr.mxu0 0.0
        %484 = vmatpush1.msra.mxu0 %v381
        %485 = vmatprep.subr.mxu0 0.0
        %486 = vmatpush1.msra.mxu0 0.0
        %487 = vmatprep.subr.mxu0 0.0
        %488 = vmatpush1.msra.mxu0 0.0
        %489 = vmatprep.subr.mxu0 0.0
        %490 = vmatpush1.msra.mxu0 0.0
        %491 = vmatprep.subr.mxu0 0.0
        %492 = vmatpush1.msra.mxu0 0.0
        %493 = vmatprep.subr.mxu0 0.0
        %494 = vmatpush1.msra.mxu0 0.0
        %495 = vmatprep.subr.mxu0 0.0
        %496 = vmatpush1.msra.mxu0 0.0
        %497 = vmatprep.subr.mxu0 0.0
        %498 = vmatpush1.msra.mxu0 0.0
        %499 = vmatprep.subr.mxu0 0.0
        %500 = vmatpush1.msra.mxu0 0.0
        %501 = vmatprep.subr.mxu0 0.0
        %502 = vmatpush1.msra.mxu0 0.0
        %503 = vmatprep.subr.mxu0 0.0
        %504 = vmatpush1.msra.mxu0 0.0
        %505 = vmatprep.subr.mxu0 0.0
        %506 = vmatpush1.msra.mxu0 0.0
        %507 = vmatprep.subr.mxu0 0.0
        %508 = vmatpush1.msra.mxu0 0.0
        %509 = vmatprep.subr.mxu0 0.0
        %510 = vmatpush1.msra.mxu0 0.0
        %511 = vmatprep.subr.mxu0 0.0
        %512 = vmatpush1.msra.mxu0 0.0
        %513 = vmatprep.subr.mxu0 0.0
        %514 = vmatpush1.msra.mxu0 0.0
        %515 = vmatprep.subr.mxu0 0.0
        %516 = vmatpush1.msra.mxu0 0.0
        %517 = vmatprep.subr.mxu0 0.0
        %518 = vmatpush1.msra.mxu0 0.0
        %519 = vmatprep.subr.mxu0 0.0
        %520 = vmatpush1.msra.mxu0 0.0
        %521 = vmatprep.subr.mxu0 0.0
        %522 = vmatpush1.msra.mxu0 0.0
        %523 = vmatprep.subr.mxu0 0.0
        %524 = vmatpush1.msra.mxu0 0.0
        %525 = vmatprep.subr.mxu0 0.0
        %526 = vmatpush1.msra.mxu0 0.0
        %527 = vmatprep.subr.mxu0 0.0
        %528 = vmatpush1.msra.mxu0 0.0
        %529 = vmatprep.subr.mxu0 0.0
        %530 = vmatpush1.msra.mxu0 0.0
        %531 = vmatprep.subr.mxu0 0.0
        %532 = vmatpush1.msra.mxu0 0.0
        %533 = vmatprep.subr.mxu0 0.0
        %534 = vmatpush1.msra.mxu0 0.0
        %535 = vmatprep.subr.mxu0 0.0
        %536 = vmatpush1.msra.mxu0 0.0
        %537 = vmatprep.subr.mxu0 0.0
        %538 = vmatpush1.msra.mxu0 0.0
        %539 = vmatprep.subr.mxu0 0.0
        %540 = vmatpush1.msra.mxu0 0.0
        %541 = vmatprep.subr.mxu0 0.0
        %542 = vmatpush1.msra.mxu0 0.0
        %543 = vmatprep.subr.mxu0 0.0
        %544 = vmatpush1.msra.mxu0 0.0
        %545 = vmatprep.subr.mxu0 0.0
        %546 = vmatpush1.msra.mxu0 0.0
        %547 = vmatprep.mubr.f32.mxu0 0.0
        %548 = vmatmul.mubr.f32.gmra.mrb[0].mxu0 %v481
        %v549 = vpop.f32.mrb[0].mxu0
        %v550 = vadd.f32 0.0, %v549
        %v551 = vpop.f32.mrb[0].mxu0
        %552 = vdwg.mxu0
        %553 = vst.msk [vmem:[%s136] sm:$0xff] %vm386, %v550
        %s554 = sand.u32 %s71, 1
        %s555 = scalar_lea.sflag [#allocation3], %s554
        %s556 = sand.u32 %s71, 1
        %s557 = smul.addr %s556, 8
        %s558 = scalar_lea.vmem [#allocation2], %s557
        // Predicated region
        $region29: #{tpu_custom_call.1} parent=27 // pred_check
          %p559 = pneg %p81
        $region30: #{tpu_custom_call.1} parent=27 // pred_check_branch
          %561 = sbr.rel (%p559) target = $region32
        $region31: #{tpu_custom_call.1} parent=27 // pred_region
          %s563 = ssub.s32 128, 128
          %564 = vsyncadd %s555, %s563
          %s565 = smul.addr %s16, 128
          %s566 = scalar_lea.hbm %s2, %s565
          %s568 = sshll.u32 %s558, 4
          %s569 = int_to_ptr.vmem [resolvable:$true] %s568
          %571 = dma.vmem_to_hbm [thread:$0]  %s569, 128, %s566, %s555
        $region32: #{tpu_custom_call.1} parent=27 // pred_fallthru
          _
      $region28: #{tpu_custom_call.1} parent=5 // pred_fallthru
        _
      %p572 = scmp.le.s32.totalorder 2, %s11
      // Predicated region
      $region33: #{tpu_custom_call.1} parent=5 // pred_check
        %p573 = pneg %p572
      $region34: #{tpu_custom_call.1} parent=5 // pred_check_branch
        %575 = sbr.rel (%p573) target = $region36
      $region35: #{tpu_custom_call.1} parent=5 // pred_region
        %s576 = ssub.s32 %s11, 2
        // Predicated region
        $region37: #{tpu_custom_call.1} parent=35 // pred_check
          %p577 = pneg %p87
        $region38: #{tpu_custom_call.1} parent=35 // pred_check_branch
          %579 = sbr.rel (%p577) target = $region40
        $region39: #{tpu_custom_call.1} parent=35 // pred_region
          %s580 = sand.u32 %s72, 1
          %s581 = scalar_lea.sflag [#allocation3], %s580
          %s582 = sand.u32 %s72, 1
          %s583 = smul.addr %s582, 8
          %s584 = scalar_lea.vmem [#allocation2], %s583
          %585 = dma.done %s581, 128
        $region40: #{tpu_custom_call.1} parent=35 // pred_fallthru
          _
      $region36: #{tpu_custom_call.1} parent=5 // pred_fallthru
        _
    $region6: #{tpu_custom_call.1} parent=1 // loop_footer
      %s15 = sadd.s32 1, %s11
    $region7: #{tpu_custom_call.1} parent=1 // loop_footer_branch
      %10 = sbr.rel target = $region3
    $region8: #{tpu_custom_call.1} parent=1 // loop_exit
      _
    %586 = vsyncpa [#allocation3], 1
    %s587 = scalar_lea.sflag [#allocation3], 1
    %588 = vsyncpa %s587, 1

</llo_original>
